<compile_context>
chip_gen: v6e
topology: v6e:2x2x1
jax: 0.10.0
libtpu: 0.0.40
codegen_flags: <defaults>
</compile_context>

<pallas_src>
import functools

import jax
import jax.numpy as jnp
from jax import lax
from jax.experimental import pallas as pl
from jax.experimental.pallas import tpu as pltpu


def _attention_stream_kernel(q_ref, d_ref, s_ref, v_ref, m_ref, l_ref,
                             m_sc, l_sc, acc_sc, *, n_valid):
    """One grid step processes a (block_rows, D) tile of q.

    Online-softmax accumulators (running max m, running denom l, rescaled
    weighted-sum acc) live in VMEM scratch and persist across grid steps.
    All contractions run on the VPU (multiply) + XLU (reductions) in f32.
    """
    k = pl.program_id(0)
    tile_n = q_ref.shape[0]

    @pl.when(k == 0)
    def _init():
        m_sc[...] = jnp.full_like(m_sc, -jnp.inf)
        l_sc[...] = jnp.zeros_like(l_sc)
        acc_sc[...] = jnp.zeros_like(acc_sc)

    # Up-cast inside the kernel (inputs arrive in their native dtype).
    q = q_ref[...].astype(jnp.float32)                    # (tile_n, D)
    d = d_ref[...].astype(jnp.float32)                    # (1, D)

    # scores: VPU multiply + XLU lane-axis reduce (no MXU matvec).
    s = jnp.sum(q * d, axis=-1, keepdims=True)            # (tile_n, 1)

    # Mask rows beyond the true N (zero-padded tail tile) to -inf so they
    # contribute nothing to the softmax or the weighted sum.
    row = k * tile_n + lax.broadcasted_iota(jnp.int32, (tile_n, 1), 0)
    s = jnp.where(row < n_valid, s, -jnp.inf)

    # Raw scores out (tiny: N floats total); normalised in the wrapper.
    s_ref[...] = s

    # Online (flash-style) softmax update.
    m_prev = m_sc[...]                                     # (1, 1)
    m_new = jnp.maximum(m_prev, jnp.max(s, axis=0, keepdims=True))
    alpha = jnp.exp(m_prev - m_new)                        # (1, 1)
    e = jnp.exp(s - m_new)                                 # (tile_n, 1), EUP
    l_sc[...] = alpha * l_sc[...] + jnp.sum(e, axis=0, keepdims=True)
    # weighted sum: VPU multiply + XLU sublane-axis reduce.
    acc_sc[...] = alpha * acc_sc[...] + jnp.sum(e * q, axis=0, keepdims=True)
    m_sc[...] = m_new

    @pl.when(k == pl.num_programs(0) - 1)
    def _finalize():
        inv_l = pl.reciprocal(l_sc[...], approx=False)     # exact, for parity
        v_ref[...] = acc_sc[...] * inv_l                   # (1, D)
        m_ref[...] = m_sc[...]
        l_ref[...] = l_sc[...]


def _pick_block_rows(n, d, itemsize):
    """~2 MiB q blocks (>=85%-of-roofline regime), multiple of 8 sublanes."""
    target_bytes = 2 * 1024 * 1024
    rows = max(8, (target_bytes // max(1, d * itemsize)) // 8 * 8)
    n8 = ((n + 7) // 8) * 8
    return int(min(n8, rows))


@functools.partial(jax.jit, static_argnames=("block_rows",))
def attention_forward(query_h, doc_h, *, block_rows=None):
    """query_h: (N, D), doc_h: (D,)  ->  (v: (D,) f32, p: (1, N) f32)."""
    N, D = query_h.shape
    if block_rows is None:
        block_rows = _pick_block_rows(N, D, query_h.dtype.itemsize)
    block_rows = max(8, (block_rows // 8) * 8)

    num_tiles = -(-N // block_rows)
    n_pad = num_tiles * block_rows

    # Pass q in its native dtype (no wrapper up-cast); pad the row axis so the
    # grid divides it exactly (padded rows are masked out in-kernel).
    q = query_h
    if n_pad != N:
        q = jnp.pad(q, ((0, n_pad - N), (0, 0)))
    d2 = doc_h.reshape(1, D)

    cost = pl.CostEstimate(
        flops=4 * n_pad * D + 8 * n_pad,
        transcendentals=n_pad + num_tiles,
        bytes_accessed=(q.size * q.dtype.itemsize
                        + d2.size * d2.dtype.itemsize
                        + 4 * (n_pad + D + 2)),
    )

    kernel = functools.partial(_attention_stream_kernel, n_valid=N)

    s_col, v2d, m_fin, l_fin = pl.pallas_call(
        kernel,
        out_shape=(
            jax.ShapeDtypeStruct((n_pad, 1), jnp.float32),   # raw scores
            jax.ShapeDtypeStruct((1, D), jnp.float32),       # v (row form)
            jax.ShapeDtypeStruct((1, 1), jnp.float32),       # final max
            jax.ShapeDtypeStruct((1, 1), jnp.float32),       # final denom
        ),
        grid_spec=pltpu.PrefetchScalarGridSpec(
            num_scalar_prefetch=0,
            grid=(num_tiles,),
            in_specs=[
                pl.BlockSpec((block_rows, D), lambda k: (k, 0)),   # q stream
                pl.BlockSpec((1, D), lambda k: (0, 0)),            # doc vector
            ],
            out_specs=(
                pl.BlockSpec((block_rows, 1), lambda k: (k, 0)),
                pl.BlockSpec((1, D), lambda k: (0, 0)),
                pl.BlockSpec((1, 1), lambda k: (0, 0)),
                pl.BlockSpec((1, 1), lambda k: (0, 0)),
            ),
            scratch_shapes=[
                pltpu.VMEM((1, 1), jnp.float32),    # running max m
                pltpu.VMEM((1, 1), jnp.float32),    # running denom l
                pltpu.VMEM((1, D), jnp.float32),    # rescaled weighted sum
            ],
        ),
        compiler_params=pltpu.CompilerParams(
            dimension_semantics=("arbitrary",),     # sequential online-softmax carry
        ),
        cost_estimate=cost,
    )(q, d2)

    # Tiny fused epilogue (N + D elements): normalise p, drop padding/row dims.
    s = s_col[:N, 0]                                         # (N,)
    p = (jnp.exp(s - m_fin[0, 0]) * (1.0 / l_fin[0, 0]))[None, :]   # (1, N)
    v = v2d[0]                                               # (D,)
    return v, p


def init_params(key, mem_dim):
    """Deterministic init of WQ (unused in forward, kept for module fidelity)."""
    kw, kb = jax.random.split(key)
    bound = 1.0 / jnp.sqrt(mem_dim)
    WQ_weight = jax.random.uniform(kw, (mem_dim, mem_dim), jnp.float32, -bound, bound)
    WQ_bias = jax.random.uniform(kb, (mem_dim,), jnp.float32, -bound, bound)
    return {"WQ_weight": WQ_weight, "WQ_bias": WQ_bias}


def _reference(query_h, doc_h):
    q = query_h.astype(jnp.float32)
    d = doc_h.astype(jnp.float32)
    s = q @ d.reshape(-1, 1)                     # (N, 1)
    p = jax.nn.softmax(s.T, axis=1)              # (1, N)
    weighted = p.T * q                           # (N, D)
    v = weighted.sum(axis=0)                     # (D,)
    return v, p


if __name__ == "__main__":
    key = jax.random.PRNGKey(0)
    k1, k2, k3, k4, k5 = jax.random.split(key, 5)

    # --- small shapes consistent with the module: 8 query vectors, hidden 32 ---
    N, mem_dim = 8, 32
    query_h = jax.random.normal(k1, (N, mem_dim), jnp.float32)
    doc_h = jax.random.normal(k2, (mem_dim,), jnp.float32)
    _params = init_params(k3, mem_dim)   # WQ: defined but unused, as in PyTorch

    v, p = attention_forward(query_h, doc_h)
    jax.block_until_ready((v, p))
    v_ref, p_ref = _reference(query_h, doc_h)
    assert v.shape == (mem_dim,) and p.shape == (1, N)
    assert jnp.allclose(v, v_ref, atol=1e-5, rtol=1e-5)
    assert jnp.allclose(p, p_ref, atol=1e-5, rtol=1e-5)

    # --- exercise the streaming / multi-tile / masked-padding path ---
    N2, D2 = 300, 128
    q2 = jax.random.normal(k4, (N2, D2), jnp.float32)
    d2 = jax.random.normal(k5, (D2,), jnp.float32)
    v2, p2 = attention_forward(q2, d2, block_rows=128)   # 3 tiles, 84 padded rows
    jax.block_until_ready((v2, p2))
    v2_ref, p2_ref = _reference(q2, d2)
    assert v2.shape == (D2,) and p2.shape == (1, N2)
    assert jnp.allclose(v2, v2_ref, atol=1e-4, rtol=1e-4)
    assert jnp.allclose(p2, p2_ref, atol=1e-5, rtol=1e-5)

    # --- bf16 inputs: no wrapper up-cast, kernel up-casts in VMEM ---
    q3 = q2.astype(jnp.bfloat16)
    d3 = d2.astype(jnp.bfloat16)
    v3, p3 = attention_forward(q3, d3, block_rows=128)
    jax.block_until_ready((v3, p3))
    v3_ref, p3_ref = _reference(q3, d3)   # reference on the same bf16-rounded values
    assert jnp.allclose(v3, v3_ref, atol=1e-4, rtol=1e-4)
    assert jnp.allclose(p3, p3_ref, atol=1e-5, rtol=1e-5)

    print("KERNEL_OK")
</pallas_src>

<mosaic_0001>
module attributes {stable_mosaic.version = 11 : i64} {
  func.func @_attention_stream_kernel(%arg0: i32, %arg1: memref<8x32xf32, #tpu.memory_space<vmem>>, %arg2: memref<1x32xf32, #tpu.memory_space<vmem>>, %arg3: memref<8x1xf32, #tpu.memory_space<vmem>>, %arg4: memref<1x32xf32, #tpu.memory_space<vmem>>, %arg5: memref<1x1xf32, #tpu.memory_space<vmem>>, %arg6: memref<1x1xf32, #tpu.memory_space<vmem>>, %arg7: memref<1x1xf32, #tpu.memory_space<vmem>>, %arg8: memref<1x1xf32, #tpu.memory_space<vmem>>, %arg9: memref<1x32xf32, #tpu.memory_space<vmem>>) attributes {dimension_semantics = [#tpu.dimension_semantics<arbitrary>], iteration_bounds = array<i64: 1>, scalar_prefetch = 0 : i64, scratch_operands = 3 : i64, tpu.core_type = #tpu.core_type<tc>, window_params = [{transform_indices = @transform_0, window_bounds = array<i64: 8, 32>}, {pipeline_mode = #tpu.pipeline_mode<synchronous>, transform_indices = @transform_1, window_bounds = array<i64: 1, 32>}, {transform_indices = @transform_2, window_bounds = array<i64: 8, 1>}, {pipeline_mode = #tpu.pipeline_mode<synchronous>, transform_indices = @transform_3, window_bounds = array<i64: 1, 32>}, {pipeline_mode = #tpu.pipeline_mode<synchronous>, transform_indices = @transform_4, window_bounds = array<i64: 1, 1>}, {pipeline_mode = #tpu.pipeline_mode<synchronous>, transform_indices = @transform_5, window_bounds = array<i64: 1, 1>}]} {
    %c0_i32 = arith.constant 0 : i32
    %0 = arith.cmpi eq, %arg0, %c0_i32 : i32
    %1 = arith.extui %0 : i1 to i32
    %c0_i32_0 = arith.constant 0 : i32
    %2 = arith.cmpi ne, %1, %c0_i32_0 : i32
    scf.if %2 {
      %cst_25 = arith.constant 0xFF800000 : f32
      %46 = vector.broadcast %cst_25 : f32 to vector<1x1xf32>
      %c0_26 = arith.constant 0 : index
      %c0_27 = arith.constant 0 : index
      %47 = vector.load %arg7[%c0_26, %c0_27] : memref<1x1xf32, #tpu.memory_space<vmem>>, vector<1x1xf32>
      tpu.vector_store %arg7[%c0_26, %c0_27], %46 {strides = array<i32>} : memref<1x1xf32, #tpu.memory_space<vmem>>, vector<1x1xf32>,
      %cst_28 = arith.constant 0.000000e+00 : f32
      %48 = vector.broadcast %cst_28 : f32 to vector<1x1xf32>
      %c0_29 = arith.constant 0 : index
      %c0_30 = arith.constant 0 : index
      %49 = vector.load %arg8[%c0_29, %c0_30] : memref<1x1xf32, #tpu.memory_space<vmem>>, vector<1x1xf32>
      tpu.vector_store %arg8[%c0_29, %c0_30], %48 {strides = array<i32>} : memref<1x1xf32, #tpu.memory_space<vmem>>, vector<1x1xf32>,
      %cst_31 = arith.constant 0.000000e+00 : f32
      %50 = vector.broadcast %cst_31 : f32 to vector<1x32xf32>
      %c0_32 = arith.constant 0 : index
      %c0_33 = arith.constant 0 : index
      %51 = vector.load %arg9[%c0_32, %c0_33] : memref<1x32xf32, #tpu.memory_space<vmem>>, vector<1x32xf32>
      tpu.vector_store %arg9[%c0_32, %c0_33], %50 {strides = array<i32>} : memref<1x32xf32, #tpu.memory_space<vmem>>, vector<1x32xf32>,
    } else {
    }
    %c0 = arith.constant 0 : index
    %c0_1 = arith.constant 0 : index
    %3 = vector.load %arg1[%c0, %c0_1] : memref<8x32xf32, #tpu.memory_space<vmem>>, vector<8x32xf32>
    %c0_2 = arith.constant 0 : index
    %c0_3 = arith.constant 0 : index
    %4 = vector.load %arg2[%c0_2, %c0_3] : memref<1x32xf32, #tpu.memory_space<vmem>>, vector<1x32xf32>
    %5 = vector.broadcast %4 : vector<1x32xf32> to vector<8x32xf32>
    %6 = arith.mulf %3, %5 : vector<8x32xf32>
    %cst = arith.constant dense<0.000000e+00> : vector<8xf32>
    %7 = vector.multi_reduction <add>, %6, %cst [1] : vector<8x32xf32> to vector<8xf32>
    %8 = vector.shape_cast %7 : vector<8xf32> to vector<8x1xf32>
    %c8_i32 = arith.constant 8 : i32
    %9 = arith.muli %arg0, %c8_i32 : i32
    %10 = tpu.iota {dimensions = array<i32: 0>} : vector<8x1xi32>
    %11 = vector.broadcast %9 : i32 to vector<8x1xi32>
    %12 = arith.addi %11, %10 : vector<8x1xi32>
    %c8_i32_4 = arith.constant 8 : i32
    %13 = vector.broadcast %c8_i32_4 : i32 to vector<8x1xi32>
    %14 = arith.cmpi slt, %12, %13 : vector<8x1xi32>
    %cst_5 = arith.constant 0xFF800000 : f32
    %15 = vector.broadcast %cst_5 : f32 to vector<8x1xf32>
    %16 = arith.select %14, %8, %15 : vector<8x1xi1>, vector<8x1xf32>
    %c0_6 = arith.constant 0 : index
    %c0_7 = arith.constant 0 : index
    %17 = vector.load %arg3[%c0_6, %c0_7] : memref<8x1xf32, #tpu.memory_space<vmem>>, vector<8x1xf32>
    tpu.vector_store %arg3[%c0_6, %c0_7], %16 {strides = array<i32>} : memref<8x1xf32, #tpu.memory_space<vmem>>, vector<8x1xf32>,
    %c0_8 = arith.constant 0 : index
    %c0_9 = arith.constant 0 : index
    %18 = vector.load %arg7[%c0_8, %c0_9] : memref<1x1xf32, #tpu.memory_space<vmem>>, vector<1x1xf32>
    %cst_10 = arith.constant dense<0xFF800000> : vector<1xf32>
    %19 = vector.multi_reduction <maximumf>, %16, %cst_10 [0] : vector<8x1xf32> to vector<1xf32>
    %20 = vector.shape_cast %19 : vector<1xf32> to vector<1x1xf32>
    %21 = arith.maximumf %18, %20 : vector<1x1xf32>
    %22 = arith.subf %18, %21 : vector<1x1xf32>
    %23 = math.exp %22 : vector<1x1xf32>
    %24 = vector.broadcast %21 : vector<1x1xf32> to vector<8x1xf32>
    %25 = arith.subf %16, %24 : vector<8x1xf32>
    %26 = math.exp %25 : vector<8x1xf32>
    %c0_11 = arith.constant 0 : index
    %c0_12 = arith.constant 0 : index
    %27 = vector.load %arg8[%c0_11, %c0_12] : memref<1x1xf32, #tpu.memory_space<vmem>>, vector<1x1xf32>
    %28 = arith.mulf %23, %27 : vector<1x1xf32>
    %cst_13 = arith.constant dense<0.000000e+00> : vector<1xf32>
    %29 = vector.multi_reduction <add>, %26, %cst_13 [0] : vector<8x1xf32> to vector<1xf32>
    %30 = vector.shape_cast %29 : vector<1xf32> to vector<1x1xf32>
    %31 = arith.addf %28, %30 : vector<1x1xf32>
    %c0_14 = arith.constant 0 : index
    %c0_15 = arith.constant 0 : index
    %32 = vector.load %arg8[%c0_14, %c0_15] : memref<1x1xf32, #tpu.memory_space<vmem>>, vector<1x1xf32>
    tpu.vector_store %arg8[%c0_14, %c0_15], %31 {strides = array<i32>} : memref<1x1xf32, #tpu.memory_space<vmem>>, vector<1x1xf32>,
    %c0_16 = arith.constant 0 : index
    %c0_17 = arith.constant 0 : index
    %33 = vector.load %arg9[%c0_16, %c0_17] : memref<1x32xf32, #tpu.memory_space<vmem>>, vector<1x32xf32>
    %34 = vector.broadcast %23 : vector<1x1xf32> to vector<1x32xf32>
    %35 = arith.mulf %34, %33 : vector<1x32xf32>
    %36 = vector.broadcast %26 : vector<8x1xf32> to vector<8x32xf32>
    %37 = arith.mulf %36, %3 : vector<8x32xf32>
    %cst_18 = arith.constant dense<0.000000e+00> : vector<32xf32>
    %38 = vector.multi_reduction <add>, %37, %cst_18 [0] : vector<8x32xf32> to vector<32xf32>
    %39 = vector.shape_cast %38 : vector<32xf32> to vector<1x32xf32>
    %40 = arith.addf %35, %39 : vector<1x32xf32>
    %c0_19 = arith.constant 0 : index
    %c0_20 = arith.constant 0 : index
    %41 = vector.load %arg9[%c0_19, %c0_20] : memref<1x32xf32, #tpu.memory_space<vmem>>, vector<1x32xf32>
    tpu.vector_store %arg9[%c0_19, %c0_20], %40 {strides = array<i32>} : memref<1x32xf32, #tpu.memory_space<vmem>>, vector<1x32xf32>,
    %c0_21 = arith.constant 0 : index
    %c0_22 = arith.constant 0 : index
    %42 = vector.load %arg7[%c0_21, %c0_22] : memref<1x1xf32, #tpu.memory_space<vmem>>, vector<1x1xf32>
    tpu.vector_store %arg7[%c0_21, %c0_22], %21 {strides = array<i32>} : memref<1x1xf32, #tpu.memory_space<vmem>>, vector<1x1xf32>,
    %c0_i32_23 = arith.constant 0 : i32
    %43 = arith.cmpi eq, %arg0, %c0_i32_23 : i32
    %44 = arith.extui %43 : i1 to i32
    %c0_i32_24 = arith.constant 0 : i32
    %45 = arith.cmpi ne, %44, %c0_i32_24 : i32
    scf.if %45 {
      %c0_25 = arith.constant 0 : index
      %c0_26 = arith.constant 0 : index
      %46 = vector.load %arg8[%c0_25, %c0_26] : memref<1x1xf32, #tpu.memory_space<vmem>>, vector<1x1xf32>
      %47 = tpu.reciprocal %46 : vector<1x1xf32> -> vector<1x1xf32>
      %c0_27 = arith.constant 0 : index
      %c0_28 = arith.constant 0 : index
      %48 = vector.load %arg9[%c0_27, %c0_28] : memref<1x32xf32, #tpu.memory_space<vmem>>, vector<1x32xf32>
      %49 = vector.broadcast %47 : vector<1x1xf32> to vector<1x32xf32>
      %50 = arith.mulf %48, %49 : vector<1x32xf32>
      %c0_29 = arith.constant 0 : index
      %c0_30 = arith.constant 0 : index
      %51 = vector.load %arg4[%c0_29, %c0_30] : memref<1x32xf32, #tpu.memory_space<vmem>>, vector<1x32xf32>
      tpu.vector_store %arg4[%c0_29, %c0_30], %50 {strides = array<i32>} : memref<1x32xf32, #tpu.memory_space<vmem>>, vector<1x32xf32>,
      %c0_31 = arith.constant 0 : index
      %c0_32 = arith.constant 0 : index
      %52 = vector.load %arg7[%c0_31, %c0_32] : memref<1x1xf32, #tpu.memory_space<vmem>>, vector<1x1xf32>
      %c0_33 = arith.constant 0 : index
      %c0_34 = arith.constant 0 : index
      %53 = vector.load %arg5[%c0_33, %c0_34] : memref<1x1xf32, #tpu.memory_space<vmem>>, vector<1x1xf32>
      tpu.vector_store %arg5[%c0_33, %c0_34], %52 {strides = array<i32>} : memref<1x1xf32, #tpu.memory_space<vmem>>, vector<1x1xf32>,
      %c0_35 = arith.constant 0 : index
      %c0_36 = arith.constant 0 : index
      %54 = vector.load %arg8[%c0_35, %c0_36] : memref<1x1xf32, #tpu.memory_space<vmem>>, vector<1x1xf32>
      %c0_37 = arith.constant 0 : index
      %c0_38 = arith.constant 0 : index
      %55 = vector.load %arg6[%c0_37, %c0_38] : memref<1x1xf32, #tpu.memory_space<vmem>>, vector<1x1xf32>
      tpu.vector_store %arg6[%c0_37, %c0_38], %54 {strides = array<i32>} : memref<1x1xf32, #tpu.memory_space<vmem>>, vector<1x1xf32>,
    } else {
    }
    return
  }
  func.func @transform_0(%arg0: i32) -> (i32, i32) {
    %c0_i32 = arith.constant 0 : i32
    %c0_i32_0 = arith.constant 0 : i32
    return %arg0, %c0_i32 : i32, i32
  }
  func.func @transform_1(%arg0: i32) -> (i32, i32) {
    %c0_i32 = arith.constant 0 : i32
    %c0_i32_0 = arith.constant 0 : i32
    %c0_i32_1 = arith.constant 0 : i32
    return %c0_i32, %c0_i32_0 : i32, i32
  }
  func.func @transform_2(%arg0: i32) -> (i32, i32) {
    %c0_i32 = arith.constant 0 : i32
    %c0_i32_0 = arith.constant 0 : i32
    return %arg0, %c0_i32 : i32, i32
  }
  func.func @transform_3(%arg0: i32) -> (i32, i32) {
    %c0_i32 = arith.constant 0 : i32
    %c0_i32_0 = arith.constant 0 : i32
    %c0_i32_1 = arith.constant 0 : i32
    return %c0_i32, %c0_i32_0 : i32, i32
  }
  func.func @transform_4(%arg0: i32) -> (i32, i32) {
    %c0_i32 = arith.constant 0 : i32
    %c0_i32_0 = arith.constant 0 : i32
    %c0_i32_1 = arith.constant 0 : i32
    return %c0_i32, %c0_i32_0 : i32, i32
  }
  func.func @transform_5(%arg0: i32) -> (i32, i32) {
    %c0_i32 = arith.constant 0 : i32
    %c0_i32_0 = arith.constant 0 : i32
    %c0_i32_1 = arith.constant 0 : i32
    return %c0_i32, %c0_i32_0 : i32, i32
  }
}

</mosaic_0001>

<llo_original>
// kernel: attention_forward.1
$region0: #{attention_forward.1}
  #allocation0 [shape = 'u32[]', space=smem, size = 0x4, offset = 0x4, fixed_abs, tag = 'smem constant byte address 0x4 - core index']
  #allocation1 [shape = 'u32[144,128]{1,0:T(1,128)}', space=vmem, size = 0x12000, scoped, tag = 'internal scratch']
  #allocation2 [shape = 'f32[1,1]{1,0:T(1,128)}', space=vmem, size = 0x200, scoped, tag = 'scratch operand']
  #allocation3 [shape = 'f32[1,1]{1,0:T(1,128)}', space=vmem, size = 0x200, scoped, tag = 'scratch operand']
  #allocation4 [shape = 'f32[1,32]{1,0:T(1,128)}', space=vmem, size = 0x200, scoped, tag = 'scratch operand']
  %s0 = inlined_call_operand.hbm [shape: f32[8,32], index: 0, kind: input, shape index: {}]
  %s1 = inlined_call_operand.vmem [shape: f32[1,32], index: 1, kind: input, shape index: {}]
  %s2 = inlined_call_operand.vmem [shape: f32[8,1], index: 2, kind: output, shape index: {0}]
  %s3 = inlined_call_operand.hbm [shape: f32[1,32], index: 3, kind: output, shape index: {1}]
  %s4 = inlined_call_operand.hbm [shape: f32[1,1], index: 4, kind: output, shape index: {2}]
  %s5 = inlined_call_operand.hbm [shape: f32[1,1], index: 5, kind: output, shape index: {3}]
  %6 = xla_tuple %s2, %s3, %s4, %s5
  %s7 = sld [smem:[#allocation0]]
  $region54: #{attention_forward.1} parent=0
    _
  %s9 = ssub.s32 1, %s7
  %s10 = scalar_select 0, %s9, %s7
  $region1: #{attention_forward.1} parent=0
    #allocation5 [shape = 'u8[4096]{0}', space=vmem, size = 0x1000, scoped, tag = 'input window, operand 0, single buffered']
    #allocation6 [shape = 's32[1]{0}', space=sflag, size = 0x4, scoped, tag = 'scoped memory for attention_forward.1']
    #allocation7 [shape = 's32[1]{0}', space=sflag, size = 0x4, scoped, tag = 'scoped memory for attention_forward.1']
    #allocation8 [shape = 'u8[512]{0}', space=vmem, size = 0x400, scoped, tag = 'output window, operand 1, single buffered']
    #allocation9 [shape = 'u8[512]{0}', space=vmem, size = 0x400, scoped, tag = 'output window, operand 2, single buffered']
    #allocation10 [shape = 's32[1]{0}', space=sflag, size = 0x4, scoped, tag = 'scoped memory for attention_forward.1']
    #allocation11 [shape = 'u8[512]{0}', space=vmem, size = 0x400, scoped, tag = 'output window, operand 3, single buffered']
    %11 = vsyncpa [#allocation6], 0
    %12 = vsyncpa [#allocation7], 0
    %13 = vsyncpa [#allocation10], 0
    // Predicated region
    $region2: #{attention_forward.1} parent=1 // pred_check
      _
    $region3: #{attention_forward.1} parent=1 // pred_check_branch
      %15 = sbr.rel (0) target = $region5
    $region4: #{attention_forward.1} parent=1 // pred_region
      %s17 = ssub.s32 128, 128
      %18 = vsyncadd [#allocation6], %s17
      %s20 = sshll.u32 [#allocation5], 4
      %s21 = int_to_ptr.vmem [resolvable:$true] %s20
      %23 = dma.hbm_to_vmem [thread:$0]  %s0, 128, %s21, [#allocation6]
    $region5: #{attention_forward.1} parent=1 // pred_fallthru
      _
    // Predicated region
    $region6: #{attention_forward.1} parent=1 // pred_check
      _
    $region7: #{attention_forward.1} parent=1 // pred_check_branch
      %25 = sbr.rel (0) target = $region9
    $region8: #{attention_forward.1} parent=1 // pred_region
      _
    $region9: #{attention_forward.1} parent=1 // pred_fallthru
      _
    // Predicated region
    $region10: #{attention_forward.1} parent=1 // pred_check
      _
    $region11: #{attention_forward.1} parent=1 // pred_check_branch
      %27 = sbr.rel (0) target = $region13
    $region12: #{attention_forward.1} parent=1 // pred_region
      %28 = dma.done [#allocation6], 128
    $region13: #{attention_forward.1} parent=1 // pred_fallthru
      _
    %p29 = scmp.eq.s32.totalorder 0, 0
    // Predicated region
    $region14: #{attention_forward.1} parent=1 // pred_check
      %p30 = pneg %p29
    $region15: #{attention_forward.1} parent=1 // pred_check_branch
      %32 = sbr.rel (%p30) target = $region17
    $region16: #{attention_forward.1} parent=1 // pred_region
      %vm33 = vcmask 0
      %34 = vst.msk [vmem:[#allocation2] sm:$0x1] %vm33, -inf
      %35 = vst.msk [vmem:[#allocation3] sm:$0x1] %vm33, 0.0
      %vm36 = vcmask 253952
      %37 = vst.msk [vmem:[#allocation4] sm:$0x1] %vm36, 0.0
    $region17: #{attention_forward.1} parent=1 // pred_fallthru
      _
    %v38 = vld [vmem:[#allocation5] sm:$0xff]
    %v39 = vld [vmem:[%s1] sm:$0x1]
    %v41 = vlaneseq
    %v42 = vshrl.u32 %v41, 7
    %v43 = vsub.s32 0, %v42
    %v44 = vrot.slane %v39, %v43
    %v46 = vmul.f32 %v38, %v44
    %vm47 = vcmask 261120
    %v48 = vsel %vm47, %v46, 0.0
    %49 = vadd.xlane.f32.xlu0 %v48
    %v50 = vpop.xlane.xlu0 %49
    %s51 = smul.u32 0, 8
    %v52 = vlaneseq
    %v53 = vshrl.u32 %v52, 7
    %v54 = vstv %s51
    %v55 = vadd.s32 %v54, %v53
    %vm56 = vcmp.lt.s32.totalorder %v55, 8
    %v57 = vsel %vm56, %v50, -inf
    %vm58 = vcmask 7168
    %59 = vst.msk [vmem:[%s2] sm:$0xff] %vm58, %v57
    %v60 = vld [vmem:[#allocation2] sm:$0x1]
    %v61 = vrot.slane %v57, 4
    %v62 = vmax.f32 %v57, %v61
    %v63 = vrot.slane %v62, 2
    %v64 = vmax.f32 %v62, %v63
    %v65 = vrot.slane %v64, 1
    %v66 = vmax.f32 %v64, %v65
    %v67 = vmax.f32 %v60, %v66
    %v68 = vsub.f32 %v60, %v67
    %v69 = vmul.f32 %v68, 1.442695
    %v70 = vpow.pop %v69
    %v72 = vlaneseq
    %v73 = vshrl.u32 %v72, 7
    %v74 = vsub.s32 0, %v73
    %v75 = vrot.slane %v67, %v74
    %v77 = vsub.f32 %v57, %v75
    %v78 = vmul.f32 %v77, 1.442695
    %v79 = vpow.pop %v78
    %v80 = vld [vmem:[#allocation3] sm:$0x1]
    %v81 = vmul.f32 %v70, %v80
    %v82 = vsel %vm58, %v79, 0.0
    %v83 = vrot.slane %v82, 4
    %v84 = vadd.f32 %v82, %v83
    %v85 = vrot.slane %v84, 2
    %v86 = vadd.f32 %v84, %v85
    %v87 = vrot.slane %v86, 1
    %v88 = vadd.f32 %v86, %v87
    %v89 = vadd.f32 %v81, %v88
    %vm90 = vcmask 0
    %91 = vst.msk [vmem:[#allocation3] sm:$0x1] %vm90, %v89
    %v92 = vld [vmem:[#allocation4] sm:$0x1]
    %94 = vset.pattern.permute.xlu0 0
    %95 = vperm.xlu0 %94, %v70
    %v96 = vpop.permute.xlu0 %95
    %v98 = vlaneseq
    %v99 = vshrl.u32 %v98, 7
    %v100 = vsub.s32 0, %v99
    %v101 = vrot.slane %v96, %v100
    %v102 = vmul.f32 %v101, %v92
    %104 = vset.pattern.permute.xlu0 0
    %105 = vperm.xlu0 %104, %v79
    %v106 = vpop.permute.xlu0 %105
    %v108 = vmul.f32 %v106, %v38
    %v109 = vsel %vm47, %v108, 0.0
    %v110 = vrot.slane %v109, 4
    %v111 = vadd.f32 %v109, %v110
    %v112 = vrot.slane %v111, 2
    %v113 = vadd.f32 %v111, %v112
    %v114 = vrot.slane %v113, 1
    %v115 = vadd.f32 %v113, %v114
    %v116 = vadd.f32 %v102, %v115
    %vm117 = vcmask 253952
    %118 = vst.msk [vmem:[#allocation4] sm:$0x1] %vm117, %v116
    %119 = vst.msk [vmem:[#allocation2] sm:$0x1] %vm90, %v67
    // Predicated region
    $region18: #{attention_forward.1} parent=1 // pred_check
      %p120 = pneg %p29
    $region19: #{attention_forward.1} parent=1 // pred_check_branch
      %122 = sbr.rel (%p120) target = $region21
    $region20: #{attention_forward.1} parent=1 // pred_region
      %v123 = vld [vmem:[#allocation3] sm:$0x1]
      %v124 = vrcp.pop %v123
      %v125 = vld [vmem:[#allocation4] sm:$0x1]
      %127 = vset.pattern.permute.xlu0 0
      %128 = vperm.xlu0 %127, %v124
      %v129 = vpop.permute.xlu0 %128
      %v131 = vlaneseq
      %v132 = vshrl.u32 %v131, 7
      %v133 = vsub.s32 0, %v132
      %v134 = vrot.slane %v129, %v133
      %v135 = vmul.f32 %v125, %v134
      %136 = vst.msk [vmem:[#allocation8] sm:$0x1] %vm117, %v135
      %v137 = vld [vmem:[#allocation2] sm:$0x1]
      %138 = vst.msk [vmem:[#allocation9] sm:$0x1] %vm90, %v137
      %v139 = vld [vmem:[#allocation3] sm:$0x1]
      %140 = vst.msk [vmem:[#allocation11] sm:$0x1] %vm90, %v139
    $region21: #{attention_forward.1} parent=1 // pred_fallthru
      _
    // Predicated region
    $region22: #{attention_forward.1} parent=1 // pred_check
      _
    $region23: #{attention_forward.1} parent=1 // pred_check_branch
      %142 = sbr.rel (0) target = $region25
    $region24: #{attention_forward.1} parent=1 // pred_region
      _
    $region25: #{attention_forward.1} parent=1 // pred_fallthru
      _
    // Predicated region
    $region26: #{attention_forward.1} parent=1 // pred_check
      _
    $region27: #{attention_forward.1} parent=1 // pred_check_branch
      %144 = sbr.rel (0) target = $region29
    $region28: #{attention_forward.1} parent=1 // pred_region
      %s146 = ssub.s32 16, 16
      %147 = vsyncadd [#allocation7], %s146
      %s149 = sshll.u32 [#allocation8], 4
      %s150 = int_to_ptr.vmem [resolvable:$true] %s149
      %152 = dma.vmem_to_hbm [thread:$0]  %s150, 16, %s3, [#allocation7]
    $region29: #{attention_forward.1} parent=1 // pred_fallthru
      _
    // Predicated region
    $region30: #{attention_forward.1} parent=1 // pred_check
      _
    $region31: #{attention_forward.1} parent=1 // pred_check_branch
      %154 = sbr.rel (0) target = $region33
    $region32: #{attention_forward.1} parent=1 // pred_region
      %s156 = ssub.s32 16, 16
      %157 = vsyncadd [#allocation10], %s156
      %s159 = sshll.u32 [#allocation9], 4
      %s160 = int_to_ptr.vmem [resolvable:$true] %s159
      %162 = dma.vmem_to_hbm [thread:$0]  %s160, 16, %s4, [#allocation10]
    $region33: #{attention_forward.1} parent=1 // pred_fallthru
      _
    // Predicated region
    $region34: #{attention_forward.1} parent=1 // pred_check
      _
    $region35: #{attention_forward.1} parent=1 // pred_check_branch
      %164 = sbr.rel (0) target = $region37
    $region36: #{attention_forward.1} parent=1 // pred_region
      %s166 = ssub.s32 16, 16
      %167 = vsyncadd [#allocation10], %s166
      %s169 = sshll.u32 [#allocation11], 4
      %s170 = int_to_ptr.vmem [resolvable:$true] %s169
      %172 = dma.vmem_to_hbm [thread:$0]  %s170, 16, %s5, [#allocation10]
    $region37: #{attention_forward.1} parent=1 // pred_fallthru
      _
    // Predicated region
    $region38: #{attention_forward.1} parent=1 // pred_check
      _
    $region39: #{attention_forward.1} parent=1 // pred_check_branch
      %174 = sbr.rel (0) target = $region41
    $region40: #{attention_forward.1} parent=1 // pred_region
      _
    $region41: #{attention_forward.1} parent=1 // pred_fallthru
      _
    // Predicated region
    $region42: #{attention_forward.1} parent=1 // pred_check
      _
    $region43: #{attention_forward.1} parent=1 // pred_check_branch
      %176 = sbr.rel (0) target = $region45
    $region44: #{attention_forward.1} parent=1 // pred_region
      %177 = dma.done [#allocation7], 16
    $region45: #{attention_forward.1} parent=1 // pred_fallthru
      _
    // Predicated region
    $region46: #{attention_forward.1} parent=1 // pred_check
      _
    $region47: #{attention_forward.1} parent=1 // pred_check_branch
      %179 = sbr.rel (0) target = $region49
    $region48: #{attention_forward.1} parent=1 // pred_region
      %180 = dma.done [#allocation10], 16
    $region49: #{attention_forward.1} parent=1 // pred_fallthru
      _
    // Predicated region
    $region50: #{attention_forward.1} parent=1 // pred_check
      _
    $region51: #{attention_forward.1} parent=1 // pred_check_branch
      %182 = sbr.rel (0) target = $region53
    $region52: #{attention_forward.1} parent=1 // pred_region
      %183 = dma.done [#allocation10], 16
    $region53: #{attention_forward.1} parent=1 // pred_fallthru
      _
    %184 = vsyncpa [#allocation6], 1
    %185 = vsyncpa [#allocation7], 1
    %186 = vsyncpa [#allocation10], 1

</llo_original>
